<compile_context>
chip_gen: v7x
topology: tpu7x:2x2x1
jax: 0.10.0
libtpu: 0.0.40
codegen_flags: <defaults>
</compile_context>

<pallas_src>
import jax
import jax.numpy as jnp
from jax.experimental import pallas as pl
from jax.experimental.pallas import tpu as pltpu


_MAX_TILE = 1 << 17        # max spatial (lane) tile, elements per channel
_TARGET_BLOCK = 1 << 15    # target elements per input block when packing samples


def _pick_blocks(n, c, hw):
    """Choose (batch_block, spatial_tile) for the flattened (N, C, H*W) layout."""
    # Spatial tile: full H*W if it fits, otherwise the largest multiple of 128
    # that divides H*W and is <= _MAX_TILE (lane-dense, unmasked tiles).
    if hw <= _MAX_TILE or hw % 128 != 0:
        tile = hw
    else:
        tile = 128
        t = 128
        while t <= _MAX_TILE:
            if hw % t == 0:
                tile = t
            t += 128
    # Batch block: pack several small samples per grid step to amortize the
    # per-step pipeline overhead (only when a sample fits in one spatial tile).
    bblk = 1
    if tile == hw:
        per_sample = max(c * hw, 1)
        want = max(1, _TARGET_BLOCK // per_sample)
        for d in range(1, n + 1):
            if n % d == 0 and d <= want:
                bblk = d
    return bblk, tile


def _mask_abs_loss_kernel(x_ref, t_ref, m_ref, num_ref, den_ref):
    s = pl.program_id(1)

    # Zero the per-sample accumulators on the first spatial tile.
    @pl.when(s == 0)
    def _():
        num_ref[...] = jnp.zeros_like(num_ref)
        den_ref[...] = jnp.zeros_like(den_ref)

    x = x_ref[...].astype(jnp.float32)   # (B, C, T)
    t = t_ref[...].astype(jnp.float32)   # (B, C, T)
    m = m_ref[...].astype(jnp.float32)   # (B, 1, T)

    diff = jnp.abs(x - t)                               # (B, C, T)
    # Sum (not mean) over channels; the 1/C factor is folded into the wrapper.
    chan_sum = jnp.sum(diff, axis=1, keepdims=True)     # (B, 1, T)
    num_ref[...] += jnp.sum(chan_sum * m, axis=2, keepdims=True)  # (B, 1, 1)
    den_ref[...] += jnp.sum(m, axis=2, keepdims=True)             # (B, 1, 1)


def mask_abs_loss(inp, target, mask):
    """inp, target: (N, C, H, W); mask: (N, 1, H, W). Returns scalar f32."""
    n, c, h, w = inp.shape
    hw = h * w
    bblk, tile = _pick_blocks(n, c, hw)

    x = inp.reshape(n, c, hw)
    t = target.reshape(n, c, hw)
    m = mask.reshape(n, 1, hw)

    grid = (n // bblk, hw // tile)
    per_sample_spec = pl.BlockSpec((bblk, 1, 1), lambda b, s: (b, 0, 0))

    num, den = pl.pallas_call(
        _mask_abs_loss_kernel,
        out_shape=(
            jax.ShapeDtypeStruct((n, 1, 1), jnp.float32),
            jax.ShapeDtypeStruct((n, 1, 1), jnp.float32),
        ),
        grid_spec=pltpu.PrefetchScalarGridSpec(
            num_scalar_prefetch=0,
            grid=grid,
            in_specs=[
                pl.BlockSpec((bblk, c, tile), lambda b, s: (b, 0, s)),
                pl.BlockSpec((bblk, c, tile), lambda b, s: (b, 0, s)),
                pl.BlockSpec((bblk, 1, tile), lambda b, s: (b, 0, s)),
            ],
            out_specs=(per_sample_spec, per_sample_spec),
        ),
        compiler_params=pltpu.CompilerParams(
            # Per-sample outputs -> batch axis safely parallel (v7x megacore);
            # the spatial axis carries the accumulation -> arbitrary.
            dimension_semantics=("parallel", "arbitrary"),
        ),
    )(x, t, m)

    num = num[:, 0, 0]
    den = den[:, 0, 0]
    per_sample = num / (jnp.float32(c) * (1.0 + den))
    return jnp.mean(per_sample)


def _reference(inp, target, mask):
    # Pure-JAX reference mirroring the PyTorch forward.
    m = jnp.squeeze(mask, axis=1)
    loss = jnp.abs(inp - target)
    loss = jnp.mean(loss, axis=1) * m
    loss = jnp.sum(loss, axis=(1, 2)) / (1.0 + jnp.sum(m, axis=(1, 2)))
    return jnp.mean(loss)


if __name__ == "__main__":
    key = jax.random.PRNGKey(0)

    def _run_case(n, c, h, w, case_key):
        k1, k2, k3 = jax.random.split(case_key, 3)
        inp = jax.random.normal(k1, (n, c, h, w), dtype=jnp.float32)
        tgt = jax.random.normal(k2, (n, c, h, w), dtype=jnp.float32)
        msk = (jax.random.uniform(k3, (n, 1, h, w)) > 0.5).astype(jnp.float32)
        out = jax.block_until_ready(mask_abs_loss(inp, tgt, msk))
        ref = _reference(inp, tgt, msk)
        assert jnp.allclose(out, ref, rtol=1e-5, atol=1e-6), (out, ref)

    k1, k2 = jax.random.split(key)
    _run_case(2, 4, 16, 16, k1)   # primary case, matches the module spec shapes
    _run_case(3, 3, 8, 24, k2)    # exercises sample packing + non-128 lane count

    print("KERNEL_OK")
</pallas_src>

<mosaic_0001>
module attributes {stable_mosaic.version = 11 : i64} {
  func.func @_mask_abs_loss_kernel(%arg0: i32, %arg1: i32, %arg2: memref<2x4x256xf32, #tpu.memory_space<vmem>>, %arg3: memref<2x4x256xf32, #tpu.memory_space<vmem>>, %arg4: memref<2x1x256xf32, #tpu.memory_space<vmem>>, %arg5: memref<2x1x1xf32, #tpu.memory_space<vmem>>, %arg6: memref<2x1x1xf32, #tpu.memory_space<vmem>>) attributes {dimension_semantics = [#tpu.dimension_semantics<parallel>, #tpu.dimension_semantics<arbitrary>], iteration_bounds = array<i64: 1, 1>, scalar_prefetch = 0 : i64, scratch_operands = 0 : i64, tpu.core_type = #tpu.core_type<tc>, window_params = [{transform_indices = @transform_0, window_bounds = array<i64: 2, 4, 256>}, {transform_indices = @transform_1, window_bounds = array<i64: 2, 4, 256>}, {transform_indices = @transform_2, window_bounds = array<i64: 2, 1, 256>}, {transform_indices = @transform_3, window_bounds = array<i64: 2, 1, 1>}, {transform_indices = @transform_4, window_bounds = array<i64: 2, 1, 1>}]} {
    %c0_i32 = arith.constant 0 : i32
    %0 = arith.cmpi eq, %arg1, %c0_i32 : i32
    %1 = arith.extui %0 : i1 to i32
    %c0_i32_0 = arith.constant 0 : i32
    %2 = arith.cmpi ne, %1, %c0_i32_0 : i32
    scf.if %2 {
      %cst_23 = arith.constant 0.000000e+00 : f32
      %21 = vector.broadcast %cst_23 : f32 to vector<2x1x1xf32>
      %c0_24 = arith.constant 0 : index
      %c0_25 = arith.constant 0 : index
      %c0_26 = arith.constant 0 : index
      %22 = vector.load %arg5[%c0_24, %c0_25, %c0_26] : memref<2x1x1xf32, #tpu.memory_space<vmem>>, vector<2x1x1xf32>
      tpu.vector_store %arg5[%c0_24, %c0_25, %c0_26], %21 {strides = array<i32>} : memref<2x1x1xf32, #tpu.memory_space<vmem>>, vector<2x1x1xf32>,
      %cst_27 = arith.constant 0.000000e+00 : f32
      %23 = vector.broadcast %cst_27 : f32 to vector<2x1x1xf32>
      %c0_28 = arith.constant 0 : index
      %c0_29 = arith.constant 0 : index
      %c0_30 = arith.constant 0 : index
      %24 = vector.load %arg6[%c0_28, %c0_29, %c0_30] : memref<2x1x1xf32, #tpu.memory_space<vmem>>, vector<2x1x1xf32>
      tpu.vector_store %arg6[%c0_28, %c0_29, %c0_30], %23 {strides = array<i32>} : memref<2x1x1xf32, #tpu.memory_space<vmem>>, vector<2x1x1xf32>,
    } else {
    }
    %c0 = arith.constant 0 : index
    %c0_1 = arith.constant 0 : index
    %c0_2 = arith.constant 0 : index
    %3 = vector.load %arg2[%c0, %c0_1, %c0_2] : memref<2x4x256xf32, #tpu.memory_space<vmem>>, vector<2x4x256xf32>
    %c0_3 = arith.constant 0 : index
    %c0_4 = arith.constant 0 : index
    %c0_5 = arith.constant 0 : index
    %4 = vector.load %arg3[%c0_3, %c0_4, %c0_5] : memref<2x4x256xf32, #tpu.memory_space<vmem>>, vector<2x4x256xf32>
    %c0_6 = arith.constant 0 : index
    %c0_7 = arith.constant 0 : index
    %c0_8 = arith.constant 0 : index
    %5 = vector.load %arg4[%c0_6, %c0_7, %c0_8] : memref<2x1x256xf32, #tpu.memory_space<vmem>>, vector<2x1x256xf32>
    %6 = arith.subf %3, %4 : vector<2x4x256xf32>
    %7 = math.absf %6 : vector<2x4x256xf32>
    %cst = arith.constant dense<0.000000e+00> : vector<2x256xf32>
    %8 = vector.multi_reduction <add>, %7, %cst [1] : vector<2x4x256xf32> to vector<2x256xf32>
    %9 = vector.shape_cast %8 : vector<2x256xf32> to vector<2x1x256xf32>
    %c0_9 = arith.constant 0 : index
    %c0_10 = arith.constant 0 : index
    %c0_11 = arith.constant 0 : index
    %10 = vector.load %arg5[%c0_9, %c0_10, %c0_11] : memref<2x1x1xf32, #tpu.memory_space<vmem>>, vector<2x1x1xf32>
    %11 = arith.mulf %9, %5 : vector<2x1x256xf32>
    %cst_12 = arith.constant dense<0.000000e+00> : vector<2x1xf32>
    %12 = vector.multi_reduction <add>, %11, %cst_12 [2] : vector<2x1x256xf32> to vector<2x1xf32>
    %13 = vector.shape_cast %12 : vector<2x1xf32> to vector<2x1x1xf32>
    %14 = arith.addf %10, %13 : vector<2x1x1xf32>
    %c0_13 = arith.constant 0 : index
    %c0_14 = arith.constant 0 : index
    %c0_15 = arith.constant 0 : index
    %15 = vector.load %arg5[%c0_13, %c0_14, %c0_15] : memref<2x1x1xf32, #tpu.memory_space<vmem>>, vector<2x1x1xf32>
    tpu.vector_store %arg5[%c0_13, %c0_14, %c0_15], %14 {strides = array<i32>} : memref<2x1x1xf32, #tpu.memory_space<vmem>>, vector<2x1x1xf32>,
    %c0_16 = arith.constant 0 : index
    %c0_17 = arith.constant 0 : index
    %c0_18 = arith.constant 0 : index
    %16 = vector.load %arg6[%c0_16, %c0_17, %c0_18] : memref<2x1x1xf32, #tpu.memory_space<vmem>>, vector<2x1x1xf32>
    %cst_19 = arith.constant dense<0.000000e+00> : vector<2x1xf32>
    %17 = vector.multi_reduction <add>, %5, %cst_19 [2] : vector<2x1x256xf32> to vector<2x1xf32>
    %18 = vector.shape_cast %17 : vector<2x1xf32> to vector<2x1x1xf32>
    %19 = arith.addf %16, %18 : vector<2x1x1xf32>
    %c0_20 = arith.constant 0 : index
    %c0_21 = arith.constant 0 : index
    %c0_22 = arith.constant 0 : index
    %20 = vector.load %arg6[%c0_20, %c0_21, %c0_22] : memref<2x1x1xf32, #tpu.memory_space<vmem>>, vector<2x1x1xf32>
    tpu.vector_store %arg6[%c0_20, %c0_21, %c0_22], %19 {strides = array<i32>} : memref<2x1x1xf32, #tpu.memory_space<vmem>>, vector<2x1x1xf32>,
    return
  }
  func.func @transform_0(%arg0: i32, %arg1: i32) -> (i32, i32, i32) {
    %c0_i32 = arith.constant 0 : i32
    %c0_i32_0 = arith.constant 0 : i32
    return %arg0, %c0_i32, %arg1 : i32, i32, i32
  }
  func.func @transform_1(%arg0: i32, %arg1: i32) -> (i32, i32, i32) {
    %c0_i32 = arith.constant 0 : i32
    %c0_i32_0 = arith.constant 0 : i32
    return %arg0, %c0_i32, %arg1 : i32, i32, i32
  }
  func.func @transform_2(%arg0: i32, %arg1: i32) -> (i32, i32, i32) {
    %c0_i32 = arith.constant 0 : i32
    %c0_i32_0 = arith.constant 0 : i32
    return %arg0, %c0_i32, %arg1 : i32, i32, i32
  }
  func.func @transform_3(%arg0: i32, %arg1: i32) -> (i32, i32, i32) {
    %c0_i32 = arith.constant 0 : i32
    %c0_i32_0 = arith.constant 0 : i32
    %c0_i32_1 = arith.constant 0 : i32
    return %arg0, %c0_i32, %c0_i32_0 : i32, i32, i32
  }
  func.func @transform_4(%arg0: i32, %arg1: i32) -> (i32, i32, i32) {
    %c0_i32 = arith.constant 0 : i32
    %c0_i32_0 = arith.constant 0 : i32
    %c0_i32_1 = arith.constant 0 : i32
    return %arg0, %c0_i32, %c0_i32_0 : i32, i32, i32
  }
}

</mosaic_0001>

<llo_original>
// kernel: tpu_custom_call.1
$region0: #{tpu_custom_call.1}
  #allocation0 [shape = 'u32[]', space=smem, size = 0x4, offset = 0x4, fixed_abs, tag = 'smem constant byte address 0x4 - core index']
  #allocation1 [shape = 'u32[144,128]{1,0:T(1,128)}', space=vmem, size = 0x12000, scoped, tag = 'internal scratch']
  %s0 = inlined_call_operand.hbm [shape: f32[2,4,256], index: 0, kind: input, shape index: {}]
  %s1 = inlined_call_operand.hbm [shape: f32[2,4,256], index: 1, kind: input, shape index: {}]
  %s2 = inlined_call_operand.vmem [shape: f32[2,1,256], index: 2, kind: input, shape index: {}]
  %s3 = inlined_call_operand.vmem [shape: f32[2,1,1], index: 3, kind: output, shape index: {0}]
  %s4 = inlined_call_operand.vmem [shape: f32[2,1,1], index: 4, kind: output, shape index: {1}]
  %5 = xla_tuple %s3, %s4
  %s6 = sld [smem:[#allocation0]]
  $region42: #{tpu_custom_call.1} parent=0
    _
  %s8 = ssub.s32 1, %s6
  %s9 = scalar_select 0, %s8, %s6
  $region1: #{tpu_custom_call.1} parent=0
    #allocation2 [shape = 'u8[8192]{0}', space=vmem, size = 0x2000, scoped, tag = 'input window, operand 0, single buffered']
    #allocation3 [shape = 's32[1]{0}', space=sflag, size = 0x4, scoped, tag = 'scoped memory for tpu_custom_call.1']
    #allocation4 [shape = 'u8[8192]{0}', space=vmem, size = 0x2000, scoped, tag = 'input window, operand 1, single buffered']
    #allocation5 [shape = 's32[1]{0}', space=sflag, size = 0x4, scoped, tag = 'scoped memory for tpu_custom_call.1']
    %10 = vsyncpa [#allocation3], 0
    %11 = vsyncpa [#allocation5], 0
    // Predicated region
    $region2: #{tpu_custom_call.1} parent=1 // pred_check
      _
    $region3: #{tpu_custom_call.1} parent=1 // pred_check_branch
      %13 = sbr.rel (0) target = $region5
    $region4: #{tpu_custom_call.1} parent=1 // pred_region
      %s15 = ssub.s32 256, 256
      %16 = vsyncadd [#allocation3], %s15
      %s17 = sshll.u32 [#allocation2], 4
      %s18 = int_to_ptr.vmem [resolvable:$true] %s17
      %23 = dma.hbm_to_vmem [thread:$0]  %s0, 256, %s18, [#allocation3], 128, 128, 8
    $region5: #{tpu_custom_call.1} parent=1 // pred_fallthru
      _
    // Predicated region
    $region6: #{tpu_custom_call.1} parent=1 // pred_check
      _
    $region7: #{tpu_custom_call.1} parent=1 // pred_check_branch
      %25 = sbr.rel (0) target = $region9
    $region8: #{tpu_custom_call.1} parent=1 // pred_region
      %s27 = ssub.s32 256, 256
      %28 = vsyncadd [#allocation5], %s27
      %s29 = sshll.u32 [#allocation4], 4
      %s30 = int_to_ptr.vmem [resolvable:$true] %s29
      %35 = dma.hbm_to_vmem [thread:$0]  %s1, 256, %s30, [#allocation5], 128, 128, 8
    $region9: #{tpu_custom_call.1} parent=1 // pred_fallthru
      _
    // Predicated region
    $region10: #{tpu_custom_call.1} parent=1 // pred_check
      _
    $region11: #{tpu_custom_call.1} parent=1 // pred_check_branch
      %37 = sbr.rel (0) target = $region13
    $region12: #{tpu_custom_call.1} parent=1 // pred_region
      _
    $region13: #{tpu_custom_call.1} parent=1 // pred_fallthru
      _
    // Predicated region
    $region14: #{tpu_custom_call.1} parent=1 // pred_check
      _
    $region15: #{tpu_custom_call.1} parent=1 // pred_check_branch
      %39 = sbr.rel (0) target = $region17
    $region16: #{tpu_custom_call.1} parent=1 // pred_region
      %40 = dma.done [#allocation3], 256
    $region17: #{tpu_custom_call.1} parent=1 // pred_fallthru
      _
    // Predicated region
    $region18: #{tpu_custom_call.1} parent=1 // pred_check
      _
    $region19: #{tpu_custom_call.1} parent=1 // pred_check_branch
      %42 = sbr.rel (0) target = $region21
    $region20: #{tpu_custom_call.1} parent=1 // pred_region
      %43 = dma.done [#allocation5], 256
    $region21: #{tpu_custom_call.1} parent=1 // pred_fallthru
      _
    %p44 = scmp.eq.s32.totalorder 0, 0
    // Predicated region
    $region22: #{tpu_custom_call.1} parent=1 // pred_check
      %p45 = pneg %p44
    $region23: #{tpu_custom_call.1} parent=1 // pred_check_branch
      %47 = sbr.rel (%p45) target = $region25
    $region24: #{tpu_custom_call.1} parent=1 // pred_region
      %vm48 = vcmask 0
      %49 = vst.msk [vmem:[%s3] sm:$0x1] %vm48, 0.0
      %50 = vst.msk [vmem:[%s3 + $0x1] sm:$0x1] %vm48, 0.0
      %51 = vst.msk [vmem:[%s4] sm:$0x1] %vm48, 0.0
      %52 = vst.msk [vmem:[%s4 + $0x1] sm:$0x1] %vm48, 0.0
    $region25: #{tpu_custom_call.1} parent=1 // pred_fallthru
      _
    %v53 = vld [vmem:[#allocation2] sm:$0xff]
    %v54 = vld [vmem:[#allocation2 + $0x8] sm:$0xff]
    %v55 = vld [vmem:[#allocation4] sm:$0xff]
    %v56 = vld [vmem:[#allocation4 + $0x8] sm:$0xff]
    %v57 = vld [vmem:[%s2] sm:$0x3]
    %v58 = vld [vmem:[%s2 + $0x2] sm:$0x3]
    %v59 = vsub.f32 %v53, %v55
    %v60 = vsub.f32 %v54, %v56
    %v61 = vand.u32 2147483647, %v59
    %v62 = vand.u32 2147483647, %v60
    %v65 = vcombine.high %v61, %v61
    %v66 = vcombine.high %v62, %v62
    %vm69 = vcmask 1043456
    %v70 = vsel %vm69, %v61, 0.0
    %v71 = vrot.slane %v70, 4
    %v72 = vadd.f32 %v70, %v71
    %v73 = vrot.slane %v72, 2
    %v74 = vadd.f32 %v72, %v73
    %v75 = vrot.slane %v74, 1
    %v76 = vadd.f32 %v74, %v75
    %v77 = vsel %vm69, %v65, 0.0
    %v78 = vrot.slane %v77, 4
    %v79 = vadd.f32 %v77, %v78
    %v80 = vrot.slane %v79, 2
    %v81 = vadd.f32 %v79, %v80
    %v82 = vrot.slane %v81, 1
    %v83 = vadd.f32 %v81, %v82
    %v84 = vsel %vm69, %v62, 0.0
    %v85 = vrot.slane %v84, 4
    %v86 = vadd.f32 %v84, %v85
    %v87 = vrot.slane %v86, 2
    %v88 = vadd.f32 %v86, %v87
    %v89 = vrot.slane %v88, 1
    %v90 = vadd.f32 %v88, %v89
    %v91 = vsel %vm69, %v66, 0.0
    %v92 = vrot.slane %v91, 4
    %v93 = vadd.f32 %v91, %v92
    %v94 = vrot.slane %v93, 2
    %v95 = vadd.f32 %v93, %v94
    %v96 = vrot.slane %v95, 1
    %v97 = vadd.f32 %v95, %v96
    %v98 = vld [vmem:[%s3] sm:$0x1]
    %v99 = vld [vmem:[%s3 + $0x1] sm:$0x1]
    %v102 = vlaneseq
    %v103 = vshrl.u32 %v102, 7
    %v104 = vsub.s32 0, %v103
    %v105 = vrot.slane %v57, %v104
    %v106 = vlaneseq
    %v107 = vshrl.u32 %v106, 7
    %v108 = vsub.s32 1, %v107
    %v109 = vrot.slane %v57, %v108
    %v110 = vlaneseq
    %v111 = vshrl.u32 %v110, 7
    %v112 = vsub.s32 0, %v111
    %v113 = vrot.slane %v58, %v112
    %v114 = vlaneseq
    %v115 = vshrl.u32 %v114, 7
    %v116 = vsub.s32 1, %v115
    %v117 = vrot.slane %v58, %v116
    %v122 = vmul.f32 %v76, %v105
    %v123 = vmul.f32 %v83, %v109
    %v124 = vmul.f32 %v90, %v113
    %v125 = vmul.f32 %v97, %v117
    %vm126 = vcmask 1040384
    %v127 = vsel %vm126, %v122, 0.0
    %v128 = vsel %vm126, %v123, 0.0
    %v129 = vadd.f32 %v127, %v128
    %130 = vadd.xlane.f32.xlu0 %v129
    %v131 = vpop.xlane.xlu0 %130
    %v132 = vsel %vm126, %v124, 0.0
    %v133 = vsel %vm126, %v125, 0.0
    %v134 = vadd.f32 %v132, %v133
    %135 = vadd.xlane.f32.xlu0 %v134
    %v136 = vpop.xlane.xlu0 %135
    %v137 = vadd.f32 %v98, %v131
    %v138 = vadd.f32 %v99, %v136
    %vm139 = vcmask 0
    %140 = vst.msk [vmem:[%s3] sm:$0x1] %vm139, %v137
    %141 = vst.msk [vmem:[%s3 + $0x1] sm:$0x1] %vm139, %v138
    %v142 = vld [vmem:[%s4] sm:$0x1]
    %v143 = vld [vmem:[%s4 + $0x1] sm:$0x1]
    %v144 = vsel %vm126, %v105, 0.0
    %v145 = vsel %vm126, %v109, 0.0
    %v146 = vadd.f32 %v144, %v145
    %147 = vadd.xlane.f32.xlu0 %v146
    %v148 = vpop.xlane.xlu0 %147
    %v149 = vsel %vm126, %v113, 0.0
    %v150 = vsel %vm126, %v117, 0.0
    %v151 = vadd.f32 %v149, %v150
    %152 = vadd.xlane.f32.xlu0 %v151
    %v153 = vpop.xlane.xlu0 %152
    %v154 = vadd.f32 %v142, %v148
    %v155 = vadd.f32 %v143, %v153
    %156 = vst.msk [vmem:[%s4] sm:$0x1] %vm139, %v154
    %157 = vst.msk [vmem:[%s4 + $0x1] sm:$0x1] %vm139, %v155
    // Predicated region
    $region26: #{tpu_custom_call.1} parent=1 // pred_check
      _
    $region27: #{tpu_custom_call.1} parent=1 // pred_check_branch
      %159 = sbr.rel (0) target = $region29
    $region28: #{tpu_custom_call.1} parent=1 // pred_region
      _
    $region29: #{tpu_custom_call.1} parent=1 // pred_fallthru
      _
    // Predicated region
    $region30: #{tpu_custom_call.1} parent=1 // pred_check
      _
    $region31: #{tpu_custom_call.1} parent=1 // pred_check_branch
      %161 = sbr.rel (0) target = $region33
    $region32: #{tpu_custom_call.1} parent=1 // pred_region
      _
    $region33: #{tpu_custom_call.1} parent=1 // pred_fallthru
      _
    // Predicated region
    $region34: #{tpu_custom_call.1} parent=1 // pred_check
      _
    $region35: #{tpu_custom_call.1} parent=1 // pred_check_branch
      %163 = sbr.rel (0) target = $region37
    $region36: #{tpu_custom_call.1} parent=1 // pred_region
      _
    $region37: #{tpu_custom_call.1} parent=1 // pred_fallthru
      _
    // Predicated region
    $region38: #{tpu_custom_call.1} parent=1 // pred_check
      _
    $region39: #{tpu_custom_call.1} parent=1 // pred_check_branch
      %165 = sbr.rel (0) target = $region41
    $region40: #{tpu_custom_call.1} parent=1 // pred_region
      _
    $region41: #{tpu_custom_call.1} parent=1 // pred_fallthru
      _
    %166 = vsyncpa [#allocation3], 1
    %167 = vsyncpa [#allocation5], 1

</llo_original>
